<compile_context>
chip_gen: v7x
topology: tpu7x:2x2x1
jax: 0.10.0
libtpu: 0.0.40
codegen_flags: <defaults>
</compile_context>

<pallas_src>
import functools

import jax
import jax.numpy as jnp
from jax.experimental import pallas as pl
from jax.experimental.pallas import tpu as pltpu


def _cdiv(a: int, b: int) -> int:
    return (a + b - 1) // b


def _round_up(x: int, m: int) -> int:
    return ((x + m - 1) // m) * m


def _balanced_tile(dim: int, max_tile: int, align: int) -> int:
    """Largest ~max_tile tile that splits `dim` into near-equal aligned blocks.

    Avoids the "B=520, tm=512 -> pad to 1024" blow-up of a fixed tile size.
    """
    n_blocks = max(1, _cdiv(dim, max_tile))
    return _round_up(_cdiv(dim, n_blocks), align)


def _fc_kernel(x_ref, w_ref, b_ref, o_ref):
    """One (tm, tn) f32 output tile, accumulated in place over the K grid axis."""
    k = pl.program_id(2)

    @pl.when(k == 0)
    def _():
        o_ref[...] = jnp.zeros_like(o_ref)

    # Canonical (M,K) x (K,N) MXU matmul: bf16 operands, f32 accumulation.
    o_ref[...] += jnp.dot(x_ref[...], w_ref[...],
                          preferred_element_type=jnp.float32)

    @pl.when(k == pl.num_programs(2) - 1)
    def _():
        # Bias rides in the final writeback step (VPU slots otherwise idle).
        o_ref[...] += b_ref[...]


def make_fc_classifier(weight, bias, *, tm_max=1024, tn_max=1024, tk_max=512,
                       compute_dtype=jnp.bfloat16):
    """Build a jitted forward(x) = x @ weight.T + bias Pallas kernel.

    Weight transpose / pad / bf16 cast are hoisted here (done once), so the
    per-call forward path only pads+casts the activations.
    """
    O, F = weight.shape
    in_itemsize = jnp.dtype(compute_dtype).itemsize
    m_align = 16 if in_itemsize == 2 else 8          # bf16 packs 2 rows / sublane

    # N tile: lane-dense; keep >=2 N blocks when out_chann permits so both
    # v7x TensorCores get work even when the whole batch fits in one M block.
    tn = _balanced_tile(O, tn_max, 128)
    if O > 128 and _round_up(O, tn) == tn:
        tn = _balanced_tile(O, _round_up(_cdiv(O, 2), 128), 128)
    # K tile: 256-aligned for the 2x256x256 MXU (v6e/v7x) when F permits.
    tk = _balanced_tile(F, tk_max, 256 if F >= 256 else 128)

    Op = _round_up(O, tn)
    Fp = _round_up(F, tk)

    # One-time weight prep: (O, F) -> padded (Fp, Op) bf16, bias -> (1, Op) f32.
    wt = jnp.pad(weight.T, ((0, Fp - F), (0, Op - O))).astype(compute_dtype)
    b2 = jnp.pad(bias, (0, Op - O)).astype(jnp.float32).reshape(1, Op)

    @jax.jit
    def forward(x):
        B = x.shape[0]
        # Cover the whole batch with one M block when it fits -> the weight is
        # streamed from HBM exactly once (small-batch inference regime).
        tm = _balanced_tile(B, tm_max, m_align)
        Bp = _round_up(B, tm)

        xp = x
        if Bp != B or Fp != F:
            xp = jnp.pad(x, ((0, Bp - B), (0, Fp - F)))
        xp = xp.astype(compute_dtype)

        grid = (Bp // tm, Op // tn, Fp // tk)

        # Double-buffered VMEM footprint (inputs bf16, resident f32 output).
        vmem_bytes = (2 * (tm * tk + tk * tn) * in_itemsize
                      + 2 * tm * tn * 4 + 2 * tn * 4)
        vmem_limit = int(min(max(2 * vmem_bytes, 32 * 1024 * 1024),
                             56 * 1024 * 1024))       # stay under v7x's 64 MiB

        cost = pl.CostEstimate(
            flops=2 * Bp * Fp * Op,
            transcendentals=0,
            bytes_accessed=(Bp * Fp * in_itemsize + Fp * Op * in_itemsize
                            + Op * 4 + Bp * Op * 4),
        )

        out_padded = pl.pallas_call(
            _fc_kernel,
            out_shape=jax.ShapeDtypeStruct((Bp, Op), jnp.float32),
            grid_spec=pltpu.PrefetchScalarGridSpec(
                num_scalar_prefetch=0,
                grid=grid,
                in_specs=[
                    pl.BlockSpec((tm, tk), lambda i, j, k: (i, k)),   # x  (M,K)
                    pl.BlockSpec((tk, tn), lambda i, j, k: (k, j)),   # W.T (K,N)
                    pl.BlockSpec((1, tn), lambda i, j, k: (0, j)),    # bias
                ],
                out_specs=pl.BlockSpec((tm, tn), lambda i, j, k: (i, j)),
            ),
            compiler_params=pltpu.CompilerParams(
                dimension_semantics=("parallel", "parallel", "arbitrary"),
                vmem_limit_bytes=vmem_limit,
            ),
            cost_estimate=cost,
        )(xp, wt, b2)

        if Bp != B or Op != O:
            out_padded = out_padded[:B, :O]
        return out_padded

    return forward


def fc_classifier_forward(x, weight, bias, **kwargs):
    """Convenience one-shot wrapper (prefer make_fc_classifier for reuse)."""
    return make_fc_classifier(weight, bias, **kwargs)(x)


if __name__ == "__main__":
    # Small shapes implied by the module: fc_num=32 inputs, out_chann=16, batch=8.
    B, FC_NUM, OUT_CHANN = 8, 32, 16

    key = jax.random.PRNGKey(0)
    kx, kw, kb = jax.random.split(key, 3)

    # Deterministic init mimicking nn.Linear's U(-1/sqrt(fan_in), 1/sqrt(fan_in)).
    bound = 1.0 / jnp.sqrt(jnp.float32(FC_NUM))
    x = jax.random.normal(kx, (B, FC_NUM), dtype=jnp.float32)
    weight = jax.random.uniform(kw, (OUT_CHANN, FC_NUM), minval=-bound,
                                maxval=bound, dtype=jnp.float32)
    bias = jax.random.uniform(kb, (OUT_CHANN,), minval=-bound, maxval=bound,
                              dtype=jnp.float32)

    forward = make_fc_classifier(weight, bias)
    out = jax.block_until_ready(forward(x))
    assert out.shape == (B, OUT_CHANN)

    # Tight check vs a reference that rounds operands to bf16 (matches MXU math:
    # exact bf16 products accumulated in f32), loose check vs the pure f32 ref.
    xb = x.astype(jnp.bfloat16).astype(jnp.float32)
    wb = weight.astype(jnp.bfloat16).astype(jnp.float32)
    ref_bf16 = xb @ wb.T + bias
    ref_f32 = x @ weight.T + bias
    assert jnp.allclose(out, ref_bf16, atol=1e-3, rtol=1e-3), "mismatch vs bf16 ref"
    assert jnp.allclose(out, ref_f32, atol=3e-2, rtol=3e-2), "mismatch vs f32 ref"

    print("KERNEL_OK")
</pallas_src>

<mosaic_0001>
module attributes {stable_mosaic.version = 11 : i64} {
  func.func @_fc_kernel(%arg0: i32, %arg1: i32, %arg2: i32, %arg3: memref<16x128xbf16, #tpu.memory_space<vmem>>, %arg4: memref<128x128xbf16, #tpu.memory_space<vmem>>, %arg5: memref<1x128xf32, #tpu.memory_space<vmem>>, %arg6: memref<16x128xf32, #tpu.memory_space<vmem>>) attributes {dimension_semantics = [#tpu.dimension_semantics<parallel>, #tpu.dimension_semantics<parallel>, #tpu.dimension_semantics<arbitrary>], iteration_bounds = array<i64: 1, 1, 1>, scalar_prefetch = 0 : i64, scratch_operands = 0 : i64, tpu.core_type = #tpu.core_type<tc>, window_params = [{transform_indices = @transform_0, window_bounds = array<i64: 16, 128>}, {transform_indices = @transform_1, window_bounds = array<i64: 128, 128>}, {transform_indices = @transform_2, window_bounds = array<i64: 1, 128>}, {transform_indices = @transform_3, window_bounds = array<i64: 16, 128>}]} {
    %c0_i32 = arith.constant 0 : i32
    %0 = arith.cmpi eq, %arg2, %c0_i32 : i32
    %1 = arith.extui %0 : i1 to i32
    %c0_i32_0 = arith.constant 0 : i32
    %2 = arith.cmpi ne, %1, %c0_i32_0 : i32
    scf.if %2 {
      %cst_10 = arith.constant 0.000000e+00 : f32
      %12 = vector.broadcast %cst_10 : f32 to vector<16x128xf32>
      %c0_11 = arith.constant 0 : index
      %c0_12 = arith.constant 0 : index
      %13 = vector.load %arg6[%c0_11, %c0_12] : memref<16x128xf32, #tpu.memory_space<vmem>>, vector<16x128xf32>
      tpu.vector_store %arg6[%c0_11, %c0_12], %12 {strides = array<i32>} : memref<16x128xf32, #tpu.memory_space<vmem>>, vector<16x128xf32>,
    } else {
    }
    %c0 = arith.constant 0 : index
    %c0_1 = arith.constant 0 : index
    %3 = vector.load %arg6[%c0, %c0_1] : memref<16x128xf32, #tpu.memory_space<vmem>>, vector<16x128xf32>
    %c0_2 = arith.constant 0 : index
    %c0_3 = arith.constant 0 : index
    %4 = vector.load %arg3[%c0_2, %c0_3] : memref<16x128xbf16, #tpu.memory_space<vmem>>, vector<16x128xbf16>
    %c0_4 = arith.constant 0 : index
    %c0_5 = arith.constant 0 : index
    %5 = vector.load %arg4[%c0_4, %c0_5] : memref<128x128xbf16, #tpu.memory_space<vmem>>, vector<128x128xbf16>
    %cst = arith.constant dense<0.000000e+00> : vector<16x128xf32>
    %6 = tpu.matmul %4, %5, %cst {dimension_numbers = #tpu.dot_dimension_numbers<[1], [0], [0], [1], [0, 0, 1, 1], [], []>} : vector<16x128xbf16>, vector<128x128xbf16>, vector<16x128xf32> -> vector<16x128xf32>
    %7 = arith.addf %3, %6 : vector<16x128xf32>
    %c0_6 = arith.constant 0 : index
    %c0_7 = arith.constant 0 : index
    %8 = vector.load %arg6[%c0_6, %c0_7] : memref<16x128xf32, #tpu.memory_space<vmem>>, vector<16x128xf32>
    tpu.vector_store %arg6[%c0_6, %c0_7], %7 {strides = array<i32>} : memref<16x128xf32, #tpu.memory_space<vmem>>, vector<16x128xf32>,
    %c0_i32_8 = arith.constant 0 : i32
    %9 = arith.cmpi eq, %arg2, %c0_i32_8 : i32
    %10 = arith.extui %9 : i1 to i32
    %c0_i32_9 = arith.constant 0 : i32
    %11 = arith.cmpi ne, %10, %c0_i32_9 : i32
    scf.if %11 {
      %c0_10 = arith.constant 0 : index
      %c0_11 = arith.constant 0 : index
      %12 = vector.load %arg6[%c0_10, %c0_11] : memref<16x128xf32, #tpu.memory_space<vmem>>, vector<16x128xf32>
      %c0_12 = arith.constant 0 : index
      %c0_13 = arith.constant 0 : index
      %13 = vector.load %arg5[%c0_12, %c0_13] : memref<1x128xf32, #tpu.memory_space<vmem>>, vector<1x128xf32>
      %14 = vector.broadcast %13 : vector<1x128xf32> to vector<16x128xf32>
      %15 = arith.addf %12, %14 : vector<16x128xf32>
      %c0_14 = arith.constant 0 : index
      %c0_15 = arith.constant 0 : index
      %16 = vector.load %arg6[%c0_14, %c0_15] : memref<16x128xf32, #tpu.memory_space<vmem>>, vector<16x128xf32>
      tpu.vector_store %arg6[%c0_14, %c0_15], %15 {strides = array<i32>} : memref<16x128xf32, #tpu.memory_space<vmem>>, vector<16x128xf32>,
    } else {
    }
    return
  }
  func.func @transform_0(%arg0: i32, %arg1: i32, %arg2: i32) -> (i32, i32) {
    %c0_i32 = arith.constant 0 : i32
    return %arg0, %arg2 : i32, i32
  }
  func.func @transform_1(%arg0: i32, %arg1: i32, %arg2: i32) -> (i32, i32) {
    %c0_i32 = arith.constant 0 : i32
    return %arg2, %arg1 : i32, i32
  }
  func.func @transform_2(%arg0: i32, %arg1: i32, %arg2: i32) -> (i32, i32) {
    %c0_i32 = arith.constant 0 : i32
    %c0_i32_0 = arith.constant 0 : i32
    return %c0_i32, %arg1 : i32, i32
  }
  func.func @transform_3(%arg0: i32, %arg1: i32, %arg2: i32) -> (i32, i32) {
    %c0_i32 = arith.constant 0 : i32
    return %arg0, %arg1 : i32, i32
  }
}

</mosaic_0001>

<llo_original>
// kernel: forward.1
$region0: #{forward.1}
  #allocation0 [shape = 'u32[]', space=smem, size = 0x4, offset = 0x4, fixed_abs, tag = 'smem constant byte address 0x4 - core index']
  #allocation1 [shape = 'u32[144,128]{1,0:T(1,128)}', space=vmem, size = 0x12000, scoped, tag = 'internal scratch']
  %s0 = inlined_call_operand.vmem [shape: bf16[16,128], index: 0, kind: input, shape index: {}]
  %s1 = inlined_call_operand.hbm [shape: bf16[128,128], index: 1, kind: input, shape index: {}]
  %s2 = inlined_call_operand.vmem [shape: f32[1,128], index: 2, kind: input, shape index: {}]
  %s3 = inlined_call_operand.vmem [shape: f32[16,128], index: 3, kind: output, shape index: {}]
  %s4 = sld [smem:[#allocation0]]
  $region34: #{forward.1} parent=0
    _
  %s6 = ssub.s32 1, %s4
  %s7 = scalar_select 0, %s6, %s4
  $region1: #{forward.1} parent=0
    #allocation2 [shape = 'u8[32768]{0}', space=vmem, size = 0x8000, scoped, tag = 'input window, operand 1, single buffered']
    #allocation3 [shape = 's32[1]{0}', space=sflag, size = 0x4, scoped, tag = 'scoped memory for forward.1']
    %8 = vsyncpa [#allocation3], 0
    // Predicated region
    $region2: #{forward.1} parent=1 // pred_check
      _
    $region3: #{forward.1} parent=1 // pred_check_branch
      %10 = sbr.rel (0) target = $region5
    $region4: #{forward.1} parent=1 // pred_region
      _
    $region5: #{forward.1} parent=1 // pred_fallthru
      _
    // Predicated region
    $region6: #{forward.1} parent=1 // pred_check
      _
    $region7: #{forward.1} parent=1 // pred_check_branch
      %12 = sbr.rel (0) target = $region9
    $region8: #{forward.1} parent=1 // pred_region
      %s14 = ssub.s32 1024, 1024
      %15 = vsyncadd [#allocation3], %s14
      %s16 = sshll.u32 [#allocation2], 4
      %s17 = int_to_ptr.vmem [resolvable:$true] %s16
      %22 = dma.hbm_to_vmem [thread:$0]  %s1, 1024, %s17, [#allocation3], 64, 64, 4
    $region9: #{forward.1} parent=1 // pred_fallthru
      _
    // Predicated region
    $region10: #{forward.1} parent=1 // pred_check
      _
    $region11: #{forward.1} parent=1 // pred_check_branch
      %24 = sbr.rel (0) target = $region13
    $region12: #{forward.1} parent=1 // pred_region
      _
    $region13: #{forward.1} parent=1 // pred_fallthru
      _
    // Predicated region
    $region14: #{forward.1} parent=1 // pred_check
      _
    $region15: #{forward.1} parent=1 // pred_check_branch
      %26 = sbr.rel (0) target = $region17
    $region16: #{forward.1} parent=1 // pred_region
      %27 = dma.done [#allocation3], 1024
    $region17: #{forward.1} parent=1 // pred_fallthru
      _
    %p29 = scmp.eq.s32.totalorder 0, 0
    // Predicated region
    $region18: #{forward.1} parent=1 // pred_check
      %p30 = pneg %p29
    $region19: #{forward.1} parent=1 // pred_check_branch
      %32 = sbr.rel (%p30) target = $region21
    $region20: #{forward.1} parent=1 // pred_region
      %33 = vst [vmem:[%s3] sm:$0xff] 0.0
      %34 = vst [vmem:[%s3 + $0x8] sm:$0xff] 0.0
    $region21: #{forward.1} parent=1 // pred_fallthru
      _
    %v35 = vld [vmem:[%s3] sm:$0xff]
    %v36 = vld [vmem:[%s3 + $0x8] sm:$0xff]
    %v37 = vld [vmem:[%s0] sm:$0xf]
    %v38 = vld [vmem:[%s0 + $0x4] sm:$0xf]
    %v39 = vld [vmem:[#allocation2] sm:$0xf]
    %v40 = vld [vmem:[#allocation2 + $0x4] sm:$0xf]
    %v41 = vld [vmem:[#allocation2 + $0x8] sm:$0xf]
    %v42 = vld [vmem:[#allocation2 + $0xc] sm:$0xf]
    %v43 = vld [vmem:[#allocation2 + $0x10] sm:$0xf]
    %v44 = vld [vmem:[#allocation2 + $0x14] sm:$0xf]
    %v45 = vld [vmem:[#allocation2 + $0x18] sm:$0xf]
    %v46 = vld [vmem:[#allocation2 + $0x1c] sm:$0xf]
    %v47 = vld [vmem:[#allocation2 + $0x20] sm:$0xf]
    %v48 = vld [vmem:[#allocation2 + $0x24] sm:$0xf]
    %v49 = vld [vmem:[#allocation2 + $0x28] sm:$0xf]
    %v50 = vld [vmem:[#allocation2 + $0x2c] sm:$0xf]
    %v51 = vld [vmem:[#allocation2 + $0x30] sm:$0xf]
    %v52 = vld [vmem:[#allocation2 + $0x34] sm:$0xf]
    %v53 = vld [vmem:[#allocation2 + $0x38] sm:$0xf]
    %v54 = vld [vmem:[#allocation2 + $0x3c] sm:$0xf]
    %v57 = vunpack.c.l.b16 %v37
    %v58 = vunpack.c.l.b16 %v38
    %v59 = vpack.c.b16 %v58, %v57
    %v77 = vunpack.c.l.b16 %v39
    %v78 = vunpack.c.l.b16 %v40
    %v79 = vunpack.c.l.b16 %v41
    %v80 = vunpack.c.l.b16 %v42
    %v81 = vunpack.c.l.b16 %v43
    %v82 = vunpack.c.l.b16 %v44
    %v83 = vunpack.c.l.b16 %v45
    %v84 = vunpack.c.l.b16 %v46
    %v85 = vunpack.c.l.b16 %v47
    %v86 = vunpack.c.l.b16 %v48
    %v87 = vunpack.c.l.b16 %v49
    %v88 = vunpack.c.l.b16 %v50
    %v89 = vunpack.c.l.b16 %v51
    %v90 = vunpack.c.l.b16 %v52
    %v91 = vunpack.c.l.b16 %v53
    %v92 = vunpack.c.l.b16 %v54
    %v93 = vpack.c.b16 %v78, %v77
    %v94 = vpack.c.b16 %v80, %v79
    %v95 = vpack.c.b16 %v82, %v81
    %v96 = vpack.c.b16 %v84, %v83
    %v97 = vpack.c.b16 %v86, %v85
    %v98 = vpack.c.b16 %v88, %v87
    %v99 = vpack.c.b16 %v90, %v89
    %v100 = vpack.c.b16 %v92, %v91
    %109 = vmatprep.subr.bf16.mxu0 0
    %110 = vmatpush1.bf16.msra.mxu0 %v93
    %111 = vmatprep.subr.bf16.mxu0 0
    %112 = vmatpush1.bf16.msra.mxu0 %v94
    %113 = vmatprep.subr.bf16.mxu0 0
    %114 = vmatpush1.bf16.msra.mxu0 %v95
    %115 = vmatprep.subr.bf16.mxu0 0
    %116 = vmatpush1.bf16.msra.mxu0 %v96
    %117 = vmatprep.subr.bf16.mxu0 0
    %118 = vmatpush1.bf16.msra.mxu0 %v97
    %119 = vmatprep.subr.bf16.mxu0 0
    %120 = vmatpush1.bf16.msra.mxu0 %v98
    %121 = vmatprep.subr.bf16.mxu0 0
    %122 = vmatpush1.bf16.msra.mxu0 %v99
    %123 = vmatprep.subr.bf16.mxu0 0
    %124 = vmatpush1.bf16.msra.mxu0 %v100
    %125 = vmatprep.subr.bf16.mxu0 0
    %126 = vmatpush1.bf16.msra.mxu0 0
    %127 = vmatprep.subr.bf16.mxu0 0
    %128 = vmatpush1.bf16.msra.mxu0 0
    %129 = vmatprep.subr.bf16.mxu0 0
    %130 = vmatpush1.bf16.msra.mxu0 0
    %131 = vmatprep.subr.bf16.mxu0 0
    %132 = vmatpush1.bf16.msra.mxu0 0
    %133 = vmatprep.subr.bf16.mxu0 0
    %134 = vmatpush1.bf16.msra.mxu0 0
    %135 = vmatprep.subr.bf16.mxu0 0
    %136 = vmatpush1.bf16.msra.mxu0 0
    %137 = vmatprep.subr.bf16.mxu0 0
    %138 = vmatpush1.bf16.msra.mxu0 0
    %139 = vmatprep.subr.bf16.mxu0 0
    %140 = vmatpush1.bf16.msra.mxu0 0
    %141 = vmatprep.mubr.bf16.mxu0 0
    %142 = vmatmul.mubr.bf16.gmra.mrb[0].mxu0 %v59
    %v143 = vpop.f32.mrb[0].mxu0
    %v144 = vadd.f32 0.0, %v143
    %v145 = vpop.f32.mrb[0].mxu0
    %v146 = vpop.f32.mrb[0].mxu0
    %v147 = vadd.f32 0.0, %v146
    %v148 = vpop.f32.mrb[0].mxu0
    %149 = vdwg.mxu0
    %v150 = vadd.f32 %v35, %v144
    %v151 = vadd.f32 %v36, %v147
    %152 = vst [vmem:[%s3] sm:$0xff] %v150
    %153 = vst [vmem:[%s3 + $0x8] sm:$0xff] %v151
    // Predicated region
    $region22: #{forward.1} parent=1 // pred_check
      %p154 = pneg %p29
    $region23: #{forward.1} parent=1 // pred_check_branch
      %156 = sbr.rel (%p154) target = $region25
    $region24: #{forward.1} parent=1 // pred_region
      %v157 = vld [vmem:[%s3] sm:$0xff]
      %v158 = vld [vmem:[%s3 + $0x8] sm:$0xff]
      %v159 = vld [vmem:[%s2] sm:$0x1]
      %v161 = vlaneseq
      %v162 = vshrl.u32 %v161, 7
      %v163 = vsub.s32 0, %v162
      %v164 = vrot.slane %v159, %v163
      %v166 = vadd.f32 %v157, %v164
      %v167 = vadd.f32 %v158, %v164
      %168 = vst [vmem:[%s3] sm:$0xff] %v166
      %169 = vst [vmem:[%s3 + $0x8] sm:$0xff] %v167
    $region25: #{forward.1} parent=1 // pred_fallthru
      _
    // Predicated region
    $region26: #{forward.1} parent=1 // pred_check
      _
    $region27: #{forward.1} parent=1 // pred_check_branch
      %171 = sbr.rel (0) target = $region29
    $region28: #{forward.1} parent=1 // pred_region
      _
    $region29: #{forward.1} parent=1 // pred_fallthru
      _
    // Predicated region
    $region30: #{forward.1} parent=1 // pred_check
      _
    $region31: #{forward.1} parent=1 // pred_check_branch
      %173 = sbr.rel (0) target = $region33
    $region32: #{forward.1} parent=1 // pred_region
      _
    $region33: #{forward.1} parent=1 // pred_fallthru
      _
    %174 = vsyncpa [#allocation3], 1

</llo_original>
